<compile_context>
chip_gen: v5e
topology: v5e:2x2
jax: 0.10.0
libtpu: 0.0.40
codegen_flags: <defaults>
</compile_context>

<pallas_src>
import functools

import jax
import jax.numpy as jnp
from jax import lax
from jax.experimental import pallas as pl
from jax.experimental.pallas import tpu as pltpu


# ----------------------------------------------------------------------------
# Weight-transform glue (mirrors the PyTorch get_weight() methods exactly).
# Torch weight layout: (C_out, C_in, 3, 3).
# ----------------------------------------------------------------------------
def weight_cd(w):
    # cd[:, :, 4] = w[:, :, 4] - w.sum(flat_taps)
    co, ci = w.shape[0], w.shape[1]
    wf = w.reshape(co, ci, 9)
    center = wf[:, :, 4] - wf.sum(axis=2)
    wf = wf.at[:, :, 4].set(center)
    return wf.reshape(co, ci, 3, 3)


def weight_ad(w, theta=1.0):
    # ad = w - theta * w[:, :, perm]
    co, ci = w.shape[0], w.shape[1]
    wf = w.reshape(co, ci, 9)
    perm = jnp.array([3, 0, 1, 6, 4, 2, 7, 8, 5], dtype=jnp.int32)
    wad = wf - theta * wf[:, :, perm]
    return wad.reshape(co, ci, 3, 3)


def weight_hd(w):
    whd = jnp.zeros_like(w)
    whd = whd.at[:, :, :, 0].set(w[:, :, :, 0])
    whd = whd.at[:, :, :, 2].set(-w[:, :, :, 0])
    return whd


def weight_vd(w):
    wvd = jnp.zeros_like(w)
    wvd = wvd.at[:, :, 0, :].set(w[:, :, 0, :])
    wvd = wvd.at[:, :, 2, :].set(-w[:, :, 0, :])
    return wvd


# ----------------------------------------------------------------------------
# Fallback base masks (only when H or W is not a power of two): rows are
# [row-above-valid, row-below-valid, col-left-valid, col-right-valid],
# shape (4, B*H*W), stored in the activation dtype.
# ----------------------------------------------------------------------------
def _make_base_masks(H, W, B, dtype):
    pix = jnp.arange(H * W)
    h = pix // W
    w = pix % W
    r0 = h >= 1          # source row h-1 inside image
    r2 = h <= H - 2      # source row h+1 inside image
    c0 = w >= 1          # source col w-1 inside image
    c2 = w <= W - 2      # source col w+1 inside image
    m = jnp.stack([r0, r2, c0, c2], axis=0).astype(dtype)   # (4, HW)
    return jnp.tile(m, (1, B))                                # (4, B*HW)


# ----------------------------------------------------------------------------
# Pallas kernel: 3x3 conv, stride 1, pad 1, spatial(-and-folded-batch) lanes.
#   x_ref: (1, Cin_pad, lanes)   w_ref: (Cout, 9*Cin_pad)   b_ref: (Cout, 1)
#   [m_ref: (4, lanes)]          o_ref: (1, Cout, lanes)
# ----------------------------------------------------------------------------
def _deconv3x3_kernel(x_ref, w_ref, b_ref, *rest, H, W, lanes, inkernel_masks):
    if inkernel_masks:
        (o_ref,) = rest
        m_ref = None
    else:
        m_ref, o_ref = rest

    x = x_ref[0]                 # (Cin_pad, lanes), native dtype (bf16 or f32)
    dt = x.dtype
    HW = H * W

    # ---- border-validity masks (0/1 in the activation dtype) --------------
    if inkernel_masks:
        # H, W are powers of two: lane % W and lane % (H*W) via bitwise AND.
        lane = lax.broadcasted_iota(jnp.int32, (1, lanes), 1)
        col = lane & (W - 1)
        pix = lane & (HW - 1)
        r0 = pix >= W            # source row h-1 valid
        r2 = pix < (HW - W)      # source row h+1 valid
        c0 = col != 0            # source col w-1 valid
        c2 = col != (W - 1)      # source col w+1 valid
        m01 = r0.astype(dt)
        m21 = r2.astype(dt)
        m10 = c0.astype(dt)
        m12 = c2.astype(dt)
        m00 = (r0 & c0).astype(dt)
        m02 = (r0 & c2).astype(dt)
        m20 = (r2 & c0).astype(dt)
        m22 = (r2 & c2).astype(dt)
    else:
        m01 = m_ref[0:1, :]
        m21 = m_ref[1:2, :]
        m10 = m_ref[2:3, :]
        m12 = m_ref[3:4, :]
        m00 = m01 * m10
        m02 = m01 * m12
        m20 = m21 * m10
        m22 = m21 * m12

    # ---- 9 taps via composed lane rolls (XLU); wrap-around is masked ------
    def rot(v, d):               # rot(v, d)[i] == v[i + d]
        return pltpu.roll(v, shift=(-d) % lanes, axis=1)

    down = rot(x, -W)            # down[i] = x[i - W]  (row above)
    up = rot(x, W)               # up[i]   = x[i + W]  (row below)

    parts = [
        rot(down, -1) * m00, down * m01, rot(down, 1) * m02,   # dh = 0
        rot(x, -1) * m10,    x,          rot(x, 1) * m12,      # dh = 1 (center unmasked)
        rot(up, -1) * m20,   up * m21,   rot(up, 1) * m22,     # dh = 2
    ]
    xs = jnp.concatenate(parts, axis=0)          # (9*Cin_pad, lanes), aligned

    # ---- single MXU matmul in the native dtype, f32 accumulation ----------
    acc = jnp.dot(w_ref[...], xs, preferred_element_type=jnp.float32)
    acc = acc + b_ref[...]                       # (Cout, 1) broadcast over lanes
    o_ref[0] = acc.astype(o_ref.dtype)


def deconv_forward(x_nchw, w_eff_oihw, b_eff, *, batch_fold=None,
                   vmem_limit_bytes=32 * 1024 * 1024):
    """DEConv forward. x_nchw: (N, Cin, H, W) -> (N, Cout, H, W)."""
    N, Cin, H, W = x_nchw.shape
    Cout = w_eff_oihw.shape[0]
    HW = H * W
    dt = x_nchw.dtype

    # Pad Cin to a multiple of 8 so each tap part is whole sublane tiles and
    # the 9-part concat needs no relayout. Matching w columns are zeroed.
    Cin_pad = -(-Cin // 8) * 8
    if Cin_pad != Cin:
        x_nchw = jnp.pad(x_nchw, ((0, 0), (0, Cin_pad - Cin), (0, 0), (0, 0)))
        w_eff_oihw = jnp.pad(
            w_eff_oihw, ((0, 0), (0, Cin_pad - Cin), (0, 0), (0, 0)))

    # Batch folding into the lane axis.  Default policy: fold as much as
    # possible while keeping >= 2 parallel grid steps (2 TCs on v7x).
    if batch_fold is None:
        batch_fold = 1
        for b in range(N, 0, -1):
            if N % b == 0 and (N // b >= 2 or N == 1):
                batch_fold = b
                break
    assert N % batch_fold == 0, "batch_fold must divide N"
    B = batch_fold
    G = N // B
    lanes = B * HW

    x_flat = x_nchw.reshape(N, Cin_pad, HW)
    if B > 1:
        x_flat = (x_flat.reshape(G, B, Cin_pad, HW)
                  .transpose(0, 2, 1, 3)
                  .reshape(G, Cin_pad, lanes))
    else:
        x_flat = x_flat.reshape(G, Cin_pad, lanes)

    # (Cout, Cin_pad, 3, 3) -> (Cout, 3, 3, Cin_pad) -> (Cout, 9*Cin_pad):
    # tap-major, channel-minor — matches the in-kernel concat order.
    # Cast to the activation dtype so the MXU runs bf16 x bf16 when x is bf16.
    w2d = (jnp.transpose(w_eff_oihw, (0, 2, 3, 1))
           .reshape(Cout, 9 * Cin_pad).astype(dt))
    b2d = b_eff.reshape(Cout, 1).astype(jnp.float32)

    inkernel_masks = ((W & (W - 1)) == 0) and ((H & (H - 1)) == 0)

    kernel = functools.partial(_deconv3x3_kernel, H=H, W=W, lanes=lanes,
                               inkernel_masks=inkernel_masks)

    in_arrays = [x_flat, w2d, b2d]
    in_specs = [
        pl.BlockSpec((1, Cin_pad, lanes), lambda g: (g, 0, 0)),
        pl.BlockSpec((Cout, 9 * Cin_pad), lambda g: (0, 0)),
        pl.BlockSpec((Cout, 1), lambda g: (0, 0)),
    ]
    if not inkernel_masks:
        masks = _make_base_masks(H, W, B, dt)
        in_arrays.append(masks)
        in_specs.append(pl.BlockSpec((4, lanes), lambda g: (0, 0)))

    itemsize = jnp.dtype(dt).itemsize
    bytes_accessed = (x_flat.size * itemsize + w2d.size * itemsize
                      + b2d.size * 4 + G * Cout * lanes * itemsize)
    if not inkernel_masks:
        bytes_accessed += 4 * lanes * itemsize
    cost = pl.CostEstimate(flops=2 * Cout * 9 * Cin_pad * N * HW,
                           transcendentals=0,
                           bytes_accessed=int(bytes_accessed))

    out_flat = pl.pallas_call(
        kernel,
        out_shape=jax.ShapeDtypeStruct((G, Cout, lanes), dt),
        grid_spec=pltpu.PrefetchScalarGridSpec(
            num_scalar_prefetch=0,
            grid=(G,),
            in_specs=in_specs,
            out_specs=pl.BlockSpec((1, Cout, lanes), lambda g: (g, 0, 0)),
        ),
        compiler_params=pltpu.CompilerParams(
            dimension_semantics=("parallel",),
            vmem_limit_bytes=vmem_limit_bytes),
        cost_estimate=cost,
    )(*in_arrays)

    if B > 1:
        out = (out_flat.reshape(G, Cout, B, HW)
               .transpose(0, 2, 1, 3)
               .reshape(N, Cout, H, W))
    else:
        out = out_flat.reshape(N, Cout, H, W)
    return out


# ----------------------------------------------------------------------------
# DEConv module-equivalent: parameters + effective weight/bias fusion.
# ----------------------------------------------------------------------------
def make_deconv_params(key, in_channels, out_channels):
    keys = jax.random.split(key, 10)
    shape_w = (out_channels, in_channels, 3, 3)
    scale = 0.1
    ws = [scale * jax.random.normal(keys[i], shape_w, dtype=jnp.float32)
          for i in range(5)]
    bs = [scale * jax.random.normal(keys[5 + i], (out_channels,),
                                    dtype=jnp.float32) for i in range(5)]
    return ws, bs


def deconv_apply(ws, bs, x_nchw):
    w1 = weight_cd(ws[0])
    w2 = weight_hd(ws[1])
    w3 = weight_vd(ws[2])
    w4 = weight_ad(ws[3], theta=1.0)
    w5 = ws[4]
    w_eff = w1 + w2 + w3 + w4 + w5
    b_eff = bs[0] + bs[1] + bs[2] + bs[3] + bs[4]
    return deconv_forward(x_nchw, w_eff, b_eff), (w_eff, b_eff)


if __name__ == "__main__":
    key = jax.random.PRNGKey(0)
    k_x, k_p = jax.random.split(key)

    N, C, H, W = 2, 4, 16, 16
    x = jax.random.normal(k_x, (N, C, H, W), dtype=jnp.float32)

    ws, bs = make_deconv_params(k_p, in_channels=C, out_channels=C)

    # Reference: lax.conv on the fused weight (PyTorch-equivalent semantics).
    out, (w_eff, b_eff) = deconv_apply(ws, bs, x)
    out = jax.block_until_ready(out)

    ref = lax.conv_general_dilated(
        x, w_eff, window_strides=(1, 1), padding=((1, 1), (1, 1)),
        dimension_numbers=("NCHW", "OIHW", "NCHW"),
        precision=lax.Precision.HIGHEST)
    ref = ref + b_eff[None, :, None, None]

    assert out.shape == (N, C, H, W)
    assert jnp.allclose(out, ref, atol=1e-3, rtol=1e-3), "f32 mismatch vs ref"

    # Batch folded into lanes (grid=(1,), lanes = 2*H*W): same result.
    out_fold = jax.block_until_ready(
        deconv_forward(x, w_eff, b_eff, batch_fold=2))
    assert out_fold.shape == (N, C, H, W)
    assert jnp.allclose(out_fold, ref, atol=1e-3, rtol=1e-3), \
        "folded-lane mismatch vs ref"

    # bf16 activations/weights fed straight to the MXU, f32 accumulation.
    x_bf = x.astype(jnp.bfloat16)
    w_bf = w_eff.astype(jnp.bfloat16)
    out_bf = jax.block_until_ready(deconv_forward(x_bf, w_bf, b_eff))

    ref_bf = lax.conv_general_dilated(
        x_bf, w_bf, window_strides=(1, 1), padding=((1, 1), (1, 1)),
        dimension_numbers=("NCHW", "OIHW", "NCHW"),
        preferred_element_type=jnp.float32)
    ref_bf = ref_bf + b_eff[None, :, None, None]

    assert out_bf.shape == (N, C, H, W)
    assert jnp.allclose(out_bf.astype(jnp.float32), ref_bf,
                        atol=5e-2, rtol=5e-2), "bf16 mismatch vs ref"

    print("KERNEL_OK")
</pallas_src>

<mosaic_0001>
module attributes {stable_mosaic.version = 11 : i64} {
  func.func @_deconv3x3_kernel(%arg0: i32, %arg1: memref<1x8x256xf32, #tpu.memory_space<vmem>>, %arg2: memref<4x72xf32, #tpu.memory_space<vmem>>, %arg3: memref<4x1xf32, #tpu.memory_space<vmem>>, %arg4: memref<1x4x256xf32, #tpu.memory_space<vmem>>) attributes {dimension_semantics = [#tpu.dimension_semantics<parallel>], iteration_bounds = array<i64: 2>, scalar_prefetch = 0 : i64, scratch_operands = 0 : i64, tpu.core_type = #tpu.core_type<tc>, window_params = [{transform_indices = @transform_0, window_bounds = array<i64: 1, 8, 256>}, {pipeline_mode = #tpu.pipeline_mode<synchronous>, transform_indices = @transform_1, window_bounds = array<i64: 4, 72>}, {pipeline_mode = #tpu.pipeline_mode<synchronous>, transform_indices = @transform_2, window_bounds = array<i64: 4, 1>}, {transform_indices = @transform_3, window_bounds = array<i64: 1, 4, 256>}]} {
    %c0 = arith.constant 0 : index
    %c0_0 = arith.constant 0 : index
    %c0_1 = arith.constant 0 : index
    %0 = vector.load %arg1[%c0, %c0_0, %c0_1] : memref<1x8x256xf32, #tpu.memory_space<vmem>>, vector<1x8x256xf32>
    %1 = vector.shape_cast %0 : vector<1x8x256xf32> to vector<8x256xf32>
    %2 = tpu.iota {dimensions = array<i32: 1>} : vector<1x256xi32>
    %c15_i32 = arith.constant 15 : i32
    %3 = vector.broadcast %c15_i32 : i32 to vector<1x256xi32>
    %4 = arith.andi %2, %3 : vector<1x256xi32>
    %c255_i32 = arith.constant 255 : i32
    %5 = vector.broadcast %c255_i32 : i32 to vector<1x256xi32>
    %6 = arith.andi %2, %5 : vector<1x256xi32>
    %c16_i32 = arith.constant 16 : i32
    %7 = vector.broadcast %c16_i32 : i32 to vector<1x256xi32>
    %8 = arith.cmpi sge, %6, %7 : vector<1x256xi32>
    %c240_i32 = arith.constant 240 : i32
    %9 = vector.broadcast %c240_i32 : i32 to vector<1x256xi32>
    %10 = arith.cmpi slt, %6, %9 : vector<1x256xi32>
    %c0_i32 = arith.constant 0 : i32
    %11 = vector.broadcast %c0_i32 : i32 to vector<1x256xi32>
    %12 = arith.cmpi ne, %4, %11 : vector<1x256xi32>
    %c15_i32_2 = arith.constant 15 : i32
    %13 = vector.broadcast %c15_i32_2 : i32 to vector<1x256xi32>
    %14 = arith.cmpi ne, %4, %13 : vector<1x256xi32>
    %15 = arith.extui %8 : vector<1x256xi1> to vector<1x256xi32>
    %16 = arith.sitofp %15 : vector<1x256xi32> to vector<1x256xf32>
    %17 = arith.extui %10 : vector<1x256xi1> to vector<1x256xi32>
    %18 = arith.sitofp %17 : vector<1x256xi32> to vector<1x256xf32>
    %19 = arith.extui %12 : vector<1x256xi1> to vector<1x256xi32>
    %20 = arith.sitofp %19 : vector<1x256xi32> to vector<1x256xf32>
    %21 = arith.extui %14 : vector<1x256xi1> to vector<1x256xi32>
    %22 = arith.sitofp %21 : vector<1x256xi32> to vector<1x256xf32>
    %23 = arith.andi %8, %12 : vector<1x256xi1>
    %24 = arith.extui %23 : vector<1x256xi1> to vector<1x256xi32>
    %25 = arith.sitofp %24 : vector<1x256xi32> to vector<1x256xf32>
    %26 = arith.andi %8, %14 : vector<1x256xi1>
    %27 = arith.extui %26 : vector<1x256xi1> to vector<1x256xi32>
    %28 = arith.sitofp %27 : vector<1x256xi32> to vector<1x256xf32>
    %29 = arith.andi %10, %12 : vector<1x256xi1>
    %30 = arith.extui %29 : vector<1x256xi1> to vector<1x256xi32>
    %31 = arith.sitofp %30 : vector<1x256xi32> to vector<1x256xf32>
    %32 = arith.andi %10, %14 : vector<1x256xi1>
    %33 = arith.extui %32 : vector<1x256xi1> to vector<1x256xi32>
    %34 = arith.sitofp %33 : vector<1x256xi32> to vector<1x256xf32>
    %c16_i32_3 = arith.constant 16 : i32
    %35 = tpu.dynamic_rotate %1 by %c16_i32_3 dim 1 : vector<8x256xf32>, i32 -> vector<8x256xf32>
    %c240_i32_4 = arith.constant 240 : i32
    %36 = tpu.dynamic_rotate %1 by %c240_i32_4 dim 1 : vector<8x256xf32>, i32 -> vector<8x256xf32>
    %c1_i32 = arith.constant 1 : i32
    %37 = tpu.dynamic_rotate %35 by %c1_i32 dim 1 : vector<8x256xf32>, i32 -> vector<8x256xf32>
    %38 = vector.broadcast %25 : vector<1x256xf32> to vector<8x256xf32>
    %39 = arith.mulf %37, %38 : vector<8x256xf32>
    %40 = vector.broadcast %16 : vector<1x256xf32> to vector<8x256xf32>
    %41 = arith.mulf %35, %40 : vector<8x256xf32>
    %c255_i32_5 = arith.constant 255 : i32
    %42 = tpu.dynamic_rotate %35 by %c255_i32_5 dim 1 : vector<8x256xf32>, i32 -> vector<8x256xf32>
    %43 = vector.broadcast %28 : vector<1x256xf32> to vector<8x256xf32>
    %44 = arith.mulf %42, %43 : vector<8x256xf32>
    %c1_i32_6 = arith.constant 1 : i32
    %45 = tpu.dynamic_rotate %1 by %c1_i32_6 dim 1 : vector<8x256xf32>, i32 -> vector<8x256xf32>
    %46 = vector.broadcast %20 : vector<1x256xf32> to vector<8x256xf32>
    %47 = arith.mulf %45, %46 : vector<8x256xf32>
    %c255_i32_7 = arith.constant 255 : i32
    %48 = tpu.dynamic_rotate %1 by %c255_i32_7 dim 1 : vector<8x256xf32>, i32 -> vector<8x256xf32>
    %49 = vector.broadcast %22 : vector<1x256xf32> to vector<8x256xf32>
    %50 = arith.mulf %48, %49 : vector<8x256xf32>
    %c1_i32_8 = arith.constant 1 : i32
    %51 = tpu.dynamic_rotate %36 by %c1_i32_8 dim 1 : vector<8x256xf32>, i32 -> vector<8x256xf32>
    %52 = vector.broadcast %31 : vector<1x256xf32> to vector<8x256xf32>
    %53 = arith.mulf %51, %52 : vector<8x256xf32>
    %54 = vector.broadcast %18 : vector<1x256xf32> to vector<8x256xf32>
    %55 = arith.mulf %36, %54 : vector<8x256xf32>
    %c255_i32_9 = arith.constant 255 : i32
    %56 = tpu.dynamic_rotate %36 by %c255_i32_9 dim 1 : vector<8x256xf32>, i32 -> vector<8x256xf32>
    %57 = vector.broadcast %34 : vector<1x256xf32> to vector<8x256xf32>
    %58 = arith.mulf %56, %57 : vector<8x256xf32>
    %59 = tpu.concatenate %39, %41, %44, %47, %1, %50, %53, %55, %58 in 0 : vector<8x256xf32>, vector<8x256xf32>, vector<8x256xf32>, vector<8x256xf32>, vector<8x256xf32>, vector<8x256xf32>, vector<8x256xf32>, vector<8x256xf32>, vector<8x256xf32> -> vector<72x256xf32>
    %c0_10 = arith.constant 0 : index
    %c0_11 = arith.constant 0 : index
    %60 = vector.load %arg2[%c0_10, %c0_11] : memref<4x72xf32, #tpu.memory_space<vmem>>, vector<4x72xf32>
    %cst = arith.constant dense<0.000000e+00> : vector<4x256xf32>
    %61 = tpu.matmul %60, %59, %cst {dimension_numbers = #tpu.dot_dimension_numbers<[1], [0], [0], [1], [0, 0, 1, 1], [], []>} : vector<4x72xf32>, vector<72x256xf32>, vector<4x256xf32> -> vector<4x256xf32>
    %c0_12 = arith.constant 0 : index
    %c0_13 = arith.constant 0 : index
    %62 = vector.load %arg3[%c0_12, %c0_13] : memref<4x1xf32, #tpu.memory_space<vmem>>, vector<4x1xf32>
    %63 = vector.broadcast %62 : vector<4x1xf32> to vector<4x256xf32>
    %64 = arith.addf %61, %63 : vector<4x256xf32>
    %c0_14 = arith.constant 0 : index
    %c0_15 = arith.constant 0 : index
    %c0_16 = arith.constant 0 : index
    %65 = vector.load %arg4[%c0_14, %c0_15, %c0_16] : memref<1x4x256xf32, #tpu.memory_space<vmem>>, vector<1x4x256xf32>
    %66 = vector.shape_cast %65 : vector<1x4x256xf32> to vector<4x256xf32>
    %67 = vector.shape_cast %64 : vector<4x256xf32> to vector<1x4x256xf32>
    tpu.vector_store %arg4[%c0_14, %c0_15, %c0_16], %67 {strides = array<i32>} : memref<1x4x256xf32, #tpu.memory_space<vmem>>, vector<1x4x256xf32>,
    return
  }
  func.func @transform_0(%arg0: i32) -> (i32, i32, i32) {
    %c0_i32 = arith.constant 0 : i32
    %c0_i32_0 = arith.constant 0 : i32
    %c0_i32_1 = arith.constant 0 : i32
    return %arg0, %c0_i32, %c0_i32_0 : i32, i32, i32
  }
  func.func @transform_1(%arg0: i32) -> (i32, i32) {
    %c0_i32 = arith.constant 0 : i32
    %c0_i32_0 = arith.constant 0 : i32
    %c0_i32_1 = arith.constant 0 : i32
    return %c0_i32, %c0_i32_0 : i32, i32
  }
  func.func @transform_2(%arg0: i32) -> (i32, i32) {
    %c0_i32 = arith.constant 0 : i32
    %c0_i32_0 = arith.constant 0 : i32
    %c0_i32_1 = arith.constant 0 : i32
    return %c0_i32, %c0_i32_0 : i32, i32
  }
  func.func @transform_3(%arg0: i32) -> (i32, i32, i32) {
    %c0_i32 = arith.constant 0 : i32
    %c0_i32_0 = arith.constant 0 : i32
    %c0_i32_1 = arith.constant 0 : i32
    return %arg0, %c0_i32, %c0_i32_0 : i32, i32, i32
  }
}

</mosaic_0001>

<llo_original>
// kernel: tpu_custom_call.1
$region0: #{tpu_custom_call.1}
  #allocation0 [shape = 'u32[]', space=smem, size = 0x4, offset = 0x4, fixed_abs, tag = 'smem constant byte address 0x4 - core index']
  #allocation1 [shape = 'u32[72,128]{1,0:T(1,128)}', space=vmem, size = 0x9000, scoped, tag = 'internal scratch']
  %s0 = inlined_call_operand.hbm [shape: f32[2,8,256], index: 0, kind: input, shape index: {}]
  %s1 = inlined_call_operand.vmem [shape: f32[4,72], index: 1, kind: input, shape index: {}]
  %s2 = inlined_call_operand.vmem [shape: f32[4,1], index: 2, kind: input, shape index: {}]
  %s3 = inlined_call_operand.hbm [shape: f32[2,4,256], index: 3, kind: output, shape index: {}]
  %s4 = sld [smem:[#allocation0]]
  $region49: #{tpu_custom_call.1} parent=0
    _
  %s6 = ssub.s32 1, %s4
  %s7 = scalar_select 0, %s6, %s4
  $region1: #{tpu_custom_call.1} parent=0
    #allocation2 [shape = 'u8[16384]{0}', space=vmem, size = 0x4000, scoped, tag = 'input window, operand 0']
    #allocation3 [shape = 's32[2]{0}', space=sflag, size = 0x8, scoped, tag = 'scoped memory for tpu_custom_call.1']
    #allocation4 [shape = 's32[2]{0}', space=sflag, size = 0x8, scoped, tag = 'scoped memory for tpu_custom_call.1']
    #allocation5 [shape = 'u8[8192]{0}', space=vmem, size = 0x2000, scoped, tag = 'output window, operand 0']
    %8 = vsyncpa [#allocation3], 0
    %s9 = scalar_lea.sflag [#allocation3], 1
    %10 = vsyncpa %s9, 0
    %11 = vsyncpa [#allocation4], 0
    %s12 = scalar_lea.sflag [#allocation4], 1
    %13 = vsyncpa %s12, 0
    loop: start=0, step=1, limit=4
    $region2: #{tpu_custom_call.1} parent=1 // loop_pre_header
      _
    $region3: #{tpu_custom_call.1} parent=1 // loop_header
      %s15 = sphi 0, %s19
      %p16 = scmp.ge.s32.totalorder %s15, 4
      %s25 = sphi 0, %s27
      %s28 = sphi 0, %s25
      %s29 = sphi 0, %s28
      %s45 = sphi 0, %s29
      %s49 = sphi 0, %s49
      %s51 = sphi 0, %s49
      %s52 = sphi 0, %s51
      %s66 = sphi 0, %s52
      %s70 = sphi 0, %s70
      %s72 = sphi 0, %s70
      %s73 = sphi 0, %s72
      %s87 = sphi 0, %s73
      %s93 = sphi 0, %s95
      %s96 = sphi 0, %s93
      %s97 = sphi 0, %s96
      %s113 = sphi 0, %s97
    $region4: #{tpu_custom_call.1} parent=1 // loop_header_branch
      %18 = sbr.rel (%p16) target = $region8
    $region5: #{tpu_custom_call.1} parent=1 // loop_body
      %s20 = ssub.s32 %s15, 1
      %s21 = ssub.s32 %s15, 2
      %s22 = sadd.s32 %s15, 1
      %s23 = ssub.s32 %s15, %s22
      %p24 = scmp.eq.s32.totalorder %s23, 0
      %s26 = sadd.s32 %s25, 1
      %s27 = scalar_select %p24, %s25, %s26
      %p30 = pneg %p24
      %p31 = scmp.eq.s32.totalorder %s15, 1
      %p32 = por %p30, %p31
      %p33 = scmp.ne.s32.totalorder %s25, %s28
      %p34 = scmp.eq.s32.totalorder %s15, 0
      %p35 = por %p33, %p34
      %p36 = scmp.ne.s32.totalorder %s25, %s28
      %p37 = scmp.eq.s32.totalorder %s20, 1
      %p38 = por %p36, %p37
      %p39 = scmp.ne.s32.totalorder %s28, %s29
      %p40 = scmp.eq.s32.totalorder %s20, 0
      %p41 = por %p39, %p40
      %p42 = scmp.ne.s32.totalorder %s28, %s29
      %p43 = scmp.eq.s32.totalorder %s21, 1
      %p44 = por %p42, %p43
      %p46 = scmp.ne.s32.totalorder %s29, %s45
      %p47 = scmp.eq.s32.totalorder %s21, 0
      %p48 = por %p46, %p47
      %s50 = sadd.s32 %s49, 1
      %p53 = scmp.eq.s32.totalorder %s15, 1
      %p54 = scmp.ne.s32.totalorder %s49, %s51
      %p55 = scmp.eq.s32.totalorder %s15, 0
      %p56 = por %p54, %p55
      %p57 = scmp.ne.s32.totalorder %s49, %s51
      %p58 = scmp.eq.s32.totalorder %s20, 1
      %p59 = por %p57, %p58
      %p60 = scmp.ne.s32.totalorder %s51, %s52
      %p61 = scmp.eq.s32.totalorder %s20, 0
      %p62 = por %p60, %p61
      %p63 = scmp.ne.s32.totalorder %s51, %s52
      %p64 = scmp.eq.s32.totalorder %s21, 1
      %p65 = por %p63, %p64
      %p67 = scmp.ne.s32.totalorder %s52, %s66
      %p68 = scmp.eq.s32.totalorder %s21, 0
      %p69 = por %p67, %p68
      %s71 = sadd.s32 %s70, 1
      %p74 = scmp.eq.s32.totalorder %s15, 1
      %p75 = scmp.ne.s32.totalorder %s70, %s72
      %p76 = scmp.eq.s32.totalorder %s15, 0
      %p77 = por %p75, %p76
      %p78 = scmp.ne.s32.totalorder %s70, %s72
      %p79 = scmp.eq.s32.totalorder %s20, 1
      %p80 = por %p78, %p79
      %p81 = scmp.ne.s32.totalorder %s72, %s73
      %p82 = scmp.eq.s32.totalorder %s20, 0
      %p83 = por %p81, %p82
      %p84 = scmp.ne.s32.totalorder %s72, %s73
      %p85 = scmp.eq.s32.totalorder %s21, 1
      %p86 = por %p84, %p85
      %p88 = scmp.ne.s32.totalorder %s73, %s87
      %p89 = scmp.eq.s32.totalorder %s21, 0
      %p90 = por %p88, %p89
      %s91 = ssub.s32 %s15, %s22
      %p92 = scmp.eq.s32.totalorder %s91, 0
      %s94 = sadd.s32 %s93, 1
      %s95 = scalar_select %p92, %s93, %s94
      %p98 = pneg %p92
      %p99 = scmp.eq.s32.totalorder %s15, 1
      %p100 = por %p98, %p99
      %p101 = scmp.ne.s32.totalorder %s93, %s96
      %p102 = scmp.eq.s32.totalorder %s15, 0
      %p103 = por %p101, %p102
      %p104 = scmp.ne.s32.totalorder %s93, %s96
      %p105 = scmp.eq.s32.totalorder %s20, 1
      %p106 = por %p104, %p105
      %p107 = scmp.ne.s32.totalorder %s96, %s97
      %p108 = scmp.eq.s32.totalorder %s20, 0
      %p109 = por %p107, %p108
      %p110 = scmp.ne.s32.totalorder %s96, %s97
      %p111 = scmp.eq.s32.totalorder %s21, 1
      %p112 = por %p110, %p111
      %p114 = scmp.ne.s32.totalorder %s97, %s113
      %p115 = scmp.eq.s32.totalorder %s21, 0
      %p116 = por %p114, %p115
      %p117 = scmp.le.s32.totalorder 1, %s15
      %p118 = scmp.lt.s32.totalorder %s15, 3
      %p119 = pnand %p117, %p118
      %p120 = pneg %p119
      // Predicated region
      $region9: #{tpu_custom_call.1} parent=5 // pred_check
        _
      $region10: #{tpu_custom_call.1} parent=5 // pred_check_branch
        %122 = sbr.rel (%p119) target = $region12
      $region11: #{tpu_custom_call.1} parent=5 // pred_region
        %s123 = ssub.s32 %s15, 1
        // Predicated region
        $region13: #{tpu_custom_call.1} parent=11 // pred_check
          %p124 = pneg %p62
        $region14: #{tpu_custom_call.1} parent=11 // pred_check_branch
          %126 = sbr.rel (%p124) target = $region16
        $region15: #{tpu_custom_call.1} parent=11 // pred_region
          _
        $region16: #{tpu_custom_call.1} parent=11 // pred_fallthru
          _
        // Predicated region
        $region17: #{tpu_custom_call.1} parent=11 // pred_check
          %p127 = pneg %p83
        $region18: #{tpu_custom_call.1} parent=11 // pred_check_branch
          %129 = sbr.rel (%p127) target = $region20
        $region19: #{tpu_custom_call.1} parent=11 // pred_region
          _
        $region20: #{tpu_custom_call.1} parent=11 // pred_fallthru
          _
      $region12: #{tpu_custom_call.1} parent=5 // pred_fallthru
        _
      %p130 = scmp.lt.s32.totalorder %s15, 2
      // Predicated region
      $region21: #{tpu_custom_call.1} parent=5 // pred_check
        %p131 = pneg %p130
      $region22: #{tpu_custom_call.1} parent=5 // pred_check_branch
        %133 = sbr.rel (%p131) target = $region24
      $region23: #{tpu_custom_call.1} parent=5 // pred_region
        // Predicated region
        $region25: #{tpu_custom_call.1} parent=23 // pred_check
          %p134 = pneg %p35
        $region26: #{tpu_custom_call.1} parent=23 // pred_check_branch
          %136 = sbr.rel (%p134) target = $region28
        $region27: #{tpu_custom_call.1} parent=23 // pred_region
          %s137 = sand.u32 %s25, 1
          %s138 = scalar_lea.sflag [#allocation3], %s137
          %s139 = sand.u32 %s25, 1
          %s140 = smul.addr %s139, 16
          %s141 = scalar_lea.vmem [#allocation2], %s140
          %143 = vsyncadd %s138, 0
          %s144 = smul.addr %s15, 2
          %s145 = smul.addr %s144, 8
          %s146 = scalar_lea.hbm %s0, %s145
          %s148 = sshll.u32 %s146, 4
          %s149 = int_to_ptr.hbm [resolvable:$true] %s148
          %s150 = sshll.u32 %s141, 4
          %s151 = int_to_ptr.vmem [resolvable:$true] %s150
          %153 = dma.hbm_to_vmem [thread:$0]  %s149, 256, %s151, %s138
        $region28: #{tpu_custom_call.1} parent=23 // pred_fallthru
          _
      $region24: #{tpu_custom_call.1} parent=5 // pred_fallthru
        _
      %p154 = scmp.le.s32.totalorder 1, %s15
      %p155 = scmp.lt.s32.totalorder %s15, 3
      %p156 = pnand %p154, %p155
      %p157 = pneg %p156
      // Predicated region
      $region29: #{tpu_custom_call.1} parent=5 // pred_check
        _
      $region30: #{tpu_custom_call.1} parent=5 // pred_check_branch
        %159 = sbr.rel (%p156) target = $region32
      $region31: #{tpu_custom_call.1} parent=5 // pred_region
        %s160 = ssub.s32 %s15, 1
        %s161 = sand.u32 %s28, 1
        %s162 = scalar_lea.sflag [#allocation3], %s161
        %s163 = sand.u32 %s28, 1
        %s164 = smul.addr %s163, 16
        %s165 = scalar_lea.vmem [#allocation2], %s164
        // Predicated region
        $region33: #{tpu_custom_call.1} parent=31 // pred_check
          %p166 = pneg %p41
        $region34: #{tpu_custom_call.1} parent=31 // pred_check_branch
          %168 = sbr.rel (%p166) target = $region36
        $region35: #{tpu_custom_call.1} parent=31 // pred_region
          %170 = dma.done %s162, 256
        $region36: #{tpu_custom_call.1} parent=31 // pred_fallthru
          _
        %s171 = sand.u32 %s28, 1
        %s172 = scalar_lea.sflag [#allocation3], %s171
        %s173 = sand.u32 %s28, 1
        %s174 = smul.addr %s173, 16
        %s175 = scalar_lea.vmem [#allocation2], %s174
        %p176 = pneg %p41
        %p177 = pneg %p38
        %p178 = pneg %p62
        %p179 = pneg %p59
        %p180 = pneg %p83
        %p181 = pneg %p80
        %p182 = pneg %p109
        %p183 = pneg %p106
        %s184 = sand.u32 %s96, 1
        %s185 = scalar_lea.sflag [#allocation4], %s184
        %s186 = sand.u32 %s96, 1
        %s187 = smul.addr %s186, 8
        %s188 = scalar_lea.vmem [#allocation5], %s187
        %v189 = vld [vmem:[%s165] sm:$0xff]
        %v190 = vld [vmem:[%s165 + $0x8] sm:$0xff]
        %v191 = vlaneseq
        %v192 = vand.u32 %v191, 127
        %v193 = vadd.s32 %v192, 128
        %v194 = vand.u32 %v192, 15
        %v195 = vand.u32 %v193, 15
        %v196 = vand.u32 %v192, 255
        %v197 = vand.u32 %v193, 255
        %vm198 = vcmp.ge.s32.totalorder %v196, 16
        %vm199 = vcmp.ge.s32.totalorder %v197, 16
        %vm200 = vcmp.lt.s32.totalorder %v196, 240
        %vm201 = vcmp.lt.s32.totalorder %v197, 240
        %vm202 = vcmp.ne.s32.totalorder %v194, 0
        %vm203 = vcmp.ne.s32.totalorder %v195, 0
        %vm204 = vcmp.ne.s32.totalorder %v194, 15
        %vm205 = vcmp.ne.s32.totalorder %v195, 15
        %v206 = vsel %vm198, 1, 0
        %v207 = vsel %vm199, 1, 0
        %v208 = vcvt.s32.f32 %v206
        %v209 = vcvt.s32.f32 %v207
        %v210 = vsel %vm200, 1, 0
        %v211 = vsel %vm201, 1, 0
        %v212 = vcvt.s32.f32 %v210
        %v213 = vcvt.s32.f32 %v211
        %v214 = vsel %vm202, 1, 0
        %v215 = vsel %vm203, 1, 0
        %v216 = vcvt.s32.f32 %v214
        %v217 = vcvt.s32.f32 %v215
        %v218 = vsel %vm204, 1, 0
        %v219 = vsel %vm205, 1, 0
        %v220 = vcvt.s32.f32 %v218
        %v221 = vcvt.s32.f32 %v219
        %vm222 = vmand %vm198, %vm202
        %vm223 = vmand %vm199, %vm203
        %v224 = vsel %vm222, 1, 0
        %v225 = vsel %vm223, 1, 0
        %v226 = vcvt.s32.f32 %v224
        %v227 = vcvt.s32.f32 %v225
        %vm228 = vmand %vm198, %vm204
        %vm229 = vmand %vm199, %vm205
        %v230 = vsel %vm228, 1, 0
        %v231 = vsel %vm229, 1, 0
        %v232 = vcvt.s32.f32 %v230
        %v233 = vcvt.s32.f32 %v231
        %vm234 = vmand %vm200, %vm202
        %vm235 = vmand %vm201, %vm203
        %v236 = vsel %vm234, 1, 0
        %v237 = vsel %vm235, 1, 0
        %v238 = vcvt.s32.f32 %v236
        %v239 = vcvt.s32.f32 %v237
        %vm240 = vmand %vm200, %vm204
        %vm241 = vmand %vm201, %vm205
        %v242 = vsel %vm240, 1, 0
        %v243 = vsel %vm241, 1, 0
        %v244 = vcvt.s32.f32 %v242
        %v245 = vcvt.s32.f32 %v243
        %246 = vrot.lane.b32.xlu0 %v189, 16
        %v247 = vpop.permute.xlu0 %246
        %248 = vrot.lane.b32.xlu0 %v190, 16
        %v249 = vpop.permute.xlu0 %248
        %vm250 = vcmp.lt.s32.totalorder %v192, 16
        %v251 = vsel %vm250, %v247, %v249
        %v252 = vsel %vm250, %v249, %v247
        %253 = vrot.lane.b32.xlu0 %v189, 112
        %v254 = vpop.permute.xlu0 %253
        %255 = vrot.lane.b32.xlu0 %v190, 112
        %v256 = vpop.permute.xlu0 %255
        %vm257 = vcmp.lt.s32.totalorder %v192, 112
        %v258 = vsel %vm257, %v254, %v256
        %v259 = vsel %vm257, %v256, %v254
        %260 = vrot.lane.b32.xlu0 %v252, 1
        %v261 = vpop.permute.xlu0 %260
        %262 = vrot.lane.b32.xlu0 %v251, 1
        %v263 = vpop.permute.xlu0 %262
        %vm264 = vcmp.lt.s32.totalorder %v192, 1
        %v265 = vsel %vm264, %v261, %v263
        %v266 = vsel %vm264, %v263, %v261
        %v267 = vmul.f32 %v266, %v226
        %v268 = vmul.f32 %v265, %v227
        %v269 = vmul.f32 %v252, %v208
        %v270 = vmul.f32 %v251, %v209
        %271 = vrot.lane.b32.xlu0 %v252, 127
        %v272 = vpop.permute.xlu0 %271
        %273 = vrot.lane.b32.xlu0 %v251, 127
        %v274 = vpop.permute.xlu0 %273
        %vm275 = vcmp.lt.s32.totalorder %v192, 127
        %v276 = vsel %vm275, %v272, %v274
        %v277 = vsel %vm275, %v274, %v272
        %v278 = vmul.f32 %v276, %v232
        %v279 = vmul.f32 %v277, %v233
        %280 = vrot.lane.b32.xlu0 %v189, 1
        %v281 = vpop.permute.xlu0 %280
        %282 = vrot.lane.b32.xlu0 %v190, 1
        %v283 = vpop.permute.xlu0 %282
        %v284 = vsel %vm264, %v281, %v283
        %v285 = vsel %vm264, %v283, %v281
        %v286 = vmul.f32 %v285, %v216
        %v287 = vmul.f32 %v284, %v217
        %288 = vrot.lane.b32.xlu0 %v189, 127
        %v289 = vpop.permute.xlu0 %288
        %290 = vrot.lane.b32.xlu0 %v190, 127
        %v291 = vpop.permute.xlu0 %290
        %v292 = vsel %vm275, %v289, %v291
        %v293 = vsel %vm275, %v291, %v289
        %v294 = vmul.f32 %v292, %v220
        %v295 = vmul.f32 %v293, %v221
        %296 = vrot.lane.b32.xlu0 %v258, 1
        %v297 = vpop.permute.xlu0 %296
        %298 = vrot.lane.b32.xlu0 %v259, 1
        %v299 = vpop.permute.xlu0 %298
        %v300 = vsel %vm264, %v297, %v299
        %v301 = vsel %vm264, %v299, %v297
        %v302 = vmul.f32 %v301, %v238
        %v303 = vmul.f32 %v300, %v239
        %v304 = vmul.f32 %v258, %v212
        %v305 = vmul.f32 %v259, %v213
        %306 = vrot.lane.b32.xlu0 %v258, 127
        %v307 = vpop.permute.xlu0 %306
        %308 = vrot.lane.b32.xlu0 %v259, 127
        %v309 = vpop.permute.xlu0 %308
        %v310 = vsel %vm275, %v307, %v309
        %v311 = vsel %vm275, %v309, %v307
        %v312 = vmul.f32 %v310, %v244
        %v313 = vmul.f32 %v311, %v245
        %v314 = vld [vmem:[%s1] sm:$0xf]
        %v315 = vld [vmem:[%s2] sm:$0xf]
        %317 = vset.pattern.permute.xlu0 0
        %318 = vperm.xlu0 %317, %v315
        %v319 = vpop.permute.xlu0 %318
        %vm321 = vcmask 588800
        %v323 = vsel %vm321, %v314, 0
        %325 = vmatpush.msra.mxu0 0.0
        %326 = vmatpush.msra.mxu0 0.0
        %327 = vmatpush.msra.mxu0 0.0
        %328 = vmatpush.msra.mxu0 0.0
        %329 = vmatpush.msra.mxu0 0.0
        %330 = vmatpush.msra.mxu0 0.0
        %331 = vmatpush.msra.mxu0 0.0
        %332 = vmatpush.msra.mxu0 %v312
        %333 = vmatpush.msra.mxu0 %v304
        %334 = vmatpush.msra.mxu0 %v302
        %335 = vmatpush.msra.mxu0 %v294
        %336 = vmatpush.msra.mxu0 %v189
        %337 = vmatpush.msra.mxu0 %v286
        %338 = vmatpush.msra.mxu0 %v278
        %339 = vmatpush.msra.mxu0 %v269
        %340 = vmatpush.msra.mxu0 %v267
        %341 = vmatmul.f32.gmra.mxu0 %v323
        %v342 = vpop.f32.mrf.mxu0
        %v343 = vadd.f32 %v319, %v342
        %344 = vdwg.mxu0
        %345 = vmatpush.msra.mxu0 0.0
        %346 = vmatpush.msra.mxu0 0.0
        %347 = vmatpush.msra.mxu0 0.0
        %348 = vmatpush.msra.mxu0 0.0
        %349 = vmatpush.msra.mxu0 0.0
        %350 = vmatpush.msra.mxu0 0.0
        %351 = vmatpush.msra.mxu0 0.0
        %352 = vmatpush.msra.mxu0 %v313
        %353 = vmatpush.msra.mxu0 %v305
        %354 = vmatpush.msra.mxu0 %v303
        %355 = vmatpush.msra.mxu0 %v295
        %356 = vmatpush.msra.mxu0 %v190
        %357 = vmatpush.msra.mxu0 %v287
        %358 = vmatpush.msra.mxu0 %v279
        %359 = vmatpush.msra.mxu0 %v270
        %360 = vmatpush.msra.mxu0 %v268
        %361 = vmatmul.f32.gmra.mxu0 %v323
        %v362 = vpop.f32.mrf.mxu0
        %v363 = vadd.f32 %v319, %v362
        %364 = vdwg.mxu0
        %v367 = vrot.slane %v363, 4
        %vm368 = vcmask 1043456
        %v369 = vsel %vm368, %v343, %v367
        %371 = vst [vmem:[%s188] sm:$0xff] %v369
        %s372 = sand.u32 %s96, 1
        %s373 = scalar_lea.sflag [#allocation4], %s372
        %s374 = sand.u32 %s96, 1
        %s375 = smul.addr %s374, 8
        %s376 = scalar_lea.vmem [#allocation5], %s375
        // Predicated region
        $region37: #{tpu_custom_call.1} parent=31 // pred_check
          %p377 = pneg %p106
        $region38: #{tpu_custom_call.1} parent=31 // pred_check_branch
          %379 = sbr.rel (%p377) target = $region40
        $region39: #{tpu_custom_call.1} parent=31 // pred_region
          %381 = vsyncadd %s373, 0
          %s382 = smul.addr %s20, 2
          %s383 = smul.addr %s382, 4
          %s384 = scalar_lea.hbm %s3, %s383
          %s386 = sshll.u32 %s376, 4
          %s387 = int_to_ptr.vmem [resolvable:$true] %s386
          %s388 = sshll.u32 %s384, 4
          %s389 = int_to_ptr.hbm [resolvable:$true] %s388
          %391 = dma.vmem_to_hbm [thread:$0]  %s387, 128, %s389, %s373
        $region40: #{tpu_custom_call.1} parent=31 // pred_fallthru
          _
      $region32: #{tpu_custom_call.1} parent=5 // pred_fallthru
        _
      %p392 = scmp.le.s32.totalorder 2, %s15
      // Predicated region
      $region41: #{tpu_custom_call.1} parent=5 // pred_check
        %p393 = pneg %p392
      $region42: #{tpu_custom_call.1} parent=5 // pred_check_branch
        %395 = sbr.rel (%p393) target = $region44
      $region43: #{tpu_custom_call.1} parent=5 // pred_region
        %s396 = ssub.s32 %s15, 2
        // Predicated region
        $region45: #{tpu_custom_call.1} parent=43 // pred_check
          %p397 = pneg %p112
        $region46: #{tpu_custom_call.1} parent=43 // pred_check_branch
          %399 = sbr.rel (%p397) target = $region48
        $region47: #{tpu_custom_call.1} parent=43 // pred_region
          %s400 = sand.u32 %s97, 1
          %s401 = scalar_lea.sflag [#allocation4], %s400
          %s402 = sand.u32 %s97, 1
          %s403 = smul.addr %s402, 8
          %s404 = scalar_lea.vmem [#allocation5], %s403
          %406 = dma.done %s401, 128
        $region48: #{tpu_custom_call.1} parent=43 // pred_fallthru
          _
      $region44: #{tpu_custom_call.1} parent=5 // pred_fallthru
        _
    $region6: #{tpu_custom_call.1} parent=1 // loop_footer
      %s19 = sadd.s32 1, %s15
    $region7: #{tpu_custom_call.1} parent=1 // loop_footer_branch
      %14 = sbr.rel target = $region3
    $region8: #{tpu_custom_call.1} parent=1 // loop_exit
      _
    %407 = vsyncpa [#allocation3], 1
    %s408 = scalar_lea.sflag [#allocation3], 1
    %409 = vsyncpa %s408, 1
    %410 = vsyncpa [#allocation4], 1
    %s411 = scalar_lea.sflag [#allocation4], 1
    %412 = vsyncpa %s411, 1

</llo_original>
